<compile_context>
chip_gen: v7x
topology: tpu7x:2x2x1
jax: 0.10.0
libtpu: 0.0.40
codegen_flags: <defaults>
</compile_context>

<pallas_src>
import math

import jax
import jax.numpy as jnp
from jax.experimental import pallas as pl
from jax.experimental.pallas import tpu as pltpu

LOG_STD_MAX = 3.0
LOG_STD_MIN = -15.0
_LOG2 = math.log(2.0)
_LOG_2PI = math.log(2.0 * math.pi)


def _make_kernel(num_net_layers, deterministic, with_logprob):
    """Kernel for a policy whose `net` has `num_net_layers` Linear layers:
    ReLU after all but the last, Identity on the last -- exactly the pattern
    produced by mlp([obs_dim] + hidden_sizes, ReLU) in the reference."""

    def kernel(*refs):
        idx = 0
        obs_ref = refs[idx]; idx += 1
        if not deterministic:
            eps_ref = refs[idx]; idx += 1
        net_refs = refs[idx:idx + 2 * num_net_layers]; idx += 2 * num_net_layers
        wmu_ref, bmu_ref = refs[idx], refs[idx + 1]; idx += 2
        if not deterministic:
            wls_ref, bls_ref = refs[idx], refs[idx + 1]; idx += 2
        out_refs = refs[idx:]

        # Trunk MLP (ReLU between layers, Identity on the last).
        h = obs_ref[...]
        for j in range(num_net_layers):
            w_ref, b_ref = net_refs[2 * j], net_refs[2 * j + 1]
            h = jnp.dot(h, w_ref[...], preferred_element_type=jnp.float32) + b_ref[...]
            if j < num_net_layers - 1:
                h = jnp.maximum(h, 0.0)

        mu = jnp.dot(h, wmu_ref[...], preferred_element_type=jnp.float32) + bmu_ref[...]

        if deterministic:
            out_refs[0][...] = mu
            return

        log_std = jnp.dot(h, wls_ref[...], preferred_element_type=jnp.float32) + bls_ref[...]
        log_std = jnp.clip(log_std, LOG_STD_MIN, LOG_STD_MAX)
        std = jnp.exp(log_std)

        eps = eps_ref[...]
        a = mu + std * eps                      # rsample (reparameterised noise)
        out_refs[0][...] = jnp.tanh(a)

        if with_logprob:
            # Normal(mu, std).log_prob(a).sum(-1); note (a - mu)/std == eps.
            logp = -0.5 * (eps * eps) - log_std - 0.5 * _LOG_2PI
            out_refs[1][...] = jnp.sum(logp, axis=-1, keepdims=True)

            # tanh-squash correction 2*(log2 - a - softplus(-2a)); per-row sum
            # here, the reference's whole-tensor .sum() finishes in the wrapper.
            x = -2.0 * a
            softplus = jnp.maximum(x, 0.0) + jnp.log1p(jnp.exp(-jnp.abs(x)))
            corr = 2.0 * (_LOG2 - a - softplus)
            out_refs[2][...] = jnp.sum(corr, axis=-1, keepdims=True)

    return kernel


def _round_up(x, m):
    return ((x + m - 1) // m) * m


def mlp_action_sampler(obs, eps, params, is_deterministic=False,
                       with_logprob=True, tile_b=1024):
    """params = (*net_w_b, wmu, bmu, wls, bls); weights (in,out), biases (1,out)."""
    num_net_layers = (len(params) - 4) // 2
    net_params = params[:2 * num_net_layers]
    wmu, bmu, wls, bls = params[2 * num_net_layers:]

    B, obs_dim = obs.shape
    act_dim = wmu.shape[1]

    # Batch tile: multiple of 8 sublanes, capped at tile_b; pad B up to a multiple.
    tb = min(tile_b, _round_up(B, 8))
    Bp = _round_up(B, tb)
    if Bp != B:
        obs = jnp.pad(obs, ((0, Bp - B), (0, 0)))
        if not is_deterministic:
            eps = jnp.pad(eps, ((0, Bp - B), (0, 0)))

    rows = lambda d: pl.BlockSpec((tb, d), lambda i: (i, 0))             # streamed rows
    resident = lambda a: pl.BlockSpec(a.shape, lambda i: (0,) * a.ndim)  # DMA'd once

    kernel = _make_kernel(num_net_layers, is_deterministic, with_logprob)

    in_specs, args = [rows(obs_dim)], [obs]
    if not is_deterministic:
        in_specs.append(rows(act_dim)); args.append(eps)
    in_specs += [resident(p) for p in net_params]; args += list(net_params)
    in_specs += [resident(wmu), resident(bmu)]; args += [wmu, bmu]
    if not is_deterministic:
        in_specs += [resident(wls), resident(bls)]; args += [wls, bls]

    if is_deterministic or not with_logprob:
        out_shape = jax.ShapeDtypeStruct((Bp, act_dim), jnp.float32)
        out_specs = rows(act_dim)
    else:
        out_shape = (jax.ShapeDtypeStruct((Bp, act_dim), jnp.float32),
                     jax.ShapeDtypeStruct((Bp, 1), jnp.float32),
                     jax.ShapeDtypeStruct((Bp, 1), jnp.float32))
        out_specs = (rows(act_dim), rows(1), rows(1))

    outs = pl.pallas_call(
        kernel,
        out_shape=out_shape,
        grid=(Bp // tb,),
        in_specs=in_specs,
        out_specs=out_specs,
        compiler_params=pltpu.CompilerParams(
            dimension_semantics=("parallel",)),   # v7x: shard batch tiles over both TCs
    )(*args)

    if is_deterministic:
        return outs[:B]
    if not with_logprob:
        return outs[:B], None
    action, lp_row, corr_row = outs
    lp = lp_row[:B, 0]
    corr_total = jnp.sum(corr_row[:B, 0])   # reference literally sums over the whole tensor
    return action[:B], lp - corr_total


def init_params(key, obs_dim, act_dim, hidden_sizes):
    """PyTorch nn.Linear-style init: U(-1/sqrt(fan_in), 1/sqrt(fan_in)); weights (in,out)."""
    def linear(k, fan_in, fan_out):
        kw, kb = jax.random.split(k)
        bound = 1.0 / math.sqrt(fan_in)
        w = jax.random.uniform(kw, (fan_in, fan_out), jnp.float32, -bound, bound)
        b = jax.random.uniform(kb, (1, fan_out), jnp.float32, -bound, bound)
        return w, b

    params = []
    sizes = [obs_dim] + list(hidden_sizes)
    for j in range(len(sizes) - 1):
        key, k = jax.random.split(key)
        params += list(linear(k, sizes[j], sizes[j + 1]))
    key, kmu, kls = jax.random.split(key, 3)
    params += list(linear(kmu, hidden_sizes[-1], act_dim))
    params += list(linear(kls, hidden_sizes[-1], act_dim))
    return tuple(params)


def reference_forward(obs, eps, params, is_deterministic=False):
    """Pure-JAX mirror of MLPActionSampler.forward (stochastic + deterministic paths)."""
    num_net_layers = (len(params) - 4) // 2
    h = obs
    for j in range(num_net_layers):
        w, b = params[2 * j], params[2 * j + 1]
        h = h @ w + b
        if j < num_net_layers - 1:
            h = jnp.maximum(h, 0.0)
    wmu, bmu, wls, bls = params[2 * num_net_layers:]
    mu = h @ wmu + bmu
    if is_deterministic:
        return mu
    log_std = jnp.clip(h @ wls + bls, LOG_STD_MIN, LOG_STD_MAX)
    std = jnp.exp(log_std)
    a = mu + std * eps
    logp = jnp.sum(-0.5 * ((a - mu) / std) ** 2 - log_std - 0.5 * _LOG_2PI, axis=-1)
    logp = logp - jnp.sum(2.0 * (_LOG2 - a - jax.nn.softplus(-2.0 * a)))
    return jnp.tanh(a), logp


if __name__ == "__main__":
    key = jax.random.PRNGKey(0)
    k_obs, k_eps, k_par = jax.random.split(key, 3)

    B, obs_dim, act_dim = 12, 16, 8
    hidden_sizes = [32, 32]

    obs = jax.random.normal(k_obs, (B, obs_dim), jnp.float32)
    # rsample noise drawn outside the kernel (reparameterization preserved,
    # deterministic under PRNGKey(0)).
    # TODO(synk): torch's internal RNG for dist.rsample() has no in-kernel
    # equivalent; the standard-normal noise is supplied explicitly instead.
    eps = jax.random.normal(k_eps, (B, act_dim), jnp.float32)
    params = init_params(k_par, obs_dim, act_dim, hidden_sizes)

    # Small tile to exercise the batch grid + padding path.
    action, logp = mlp_action_sampler(obs, eps, params, tile_b=8)
    jax.block_until_ready((action, logp))

    a_ref, lp_ref = reference_forward(obs, eps, params)
    mu_det = mlp_action_sampler(obs, eps, params, is_deterministic=True, tile_b=8)
    mu_ref = reference_forward(obs, eps, params, is_deterministic=True)
    act_nolp, none_lp = mlp_action_sampler(obs, eps, params, with_logprob=False)  # default tile
    act_default, logp_default = mlp_action_sampler(obs, eps, params)              # default tile
    jax.block_until_ready((mu_det, act_nolp, act_default, logp_default))

    assert action.shape == (B, act_dim) and logp.shape == (B,)
    assert none_lp is None
    assert jnp.allclose(action, a_ref, atol=1e-5, rtol=1e-5)
    assert jnp.allclose(logp, lp_ref, atol=1e-4, rtol=1e-5)
    assert jnp.allclose(mu_det, mu_ref, atol=1e-5, rtol=1e-5)
    assert jnp.allclose(act_nolp, a_ref, atol=1e-5, rtol=1e-5)
    assert jnp.allclose(act_default, a_ref, atol=1e-5, rtol=1e-5)
    assert jnp.allclose(logp_default, lp_ref, atol=1e-4, rtol=1e-5)

    print("KERNEL_OK")
</pallas_src>

<mosaic_0001>
module attributes {stable_mosaic.version = 11 : i64} {
  func.func @kernel(%arg0: i32, %arg1: memref<8x16xf32, #tpu.memory_space<vmem>>, %arg2: memref<8x8xf32, #tpu.memory_space<vmem>>, %arg3: memref<16x32xf32, #tpu.memory_space<vmem>>, %arg4: memref<1x32xf32, #tpu.memory_space<vmem>>, %arg5: memref<32x32xf32, #tpu.memory_space<vmem>>, %arg6: memref<1x32xf32, #tpu.memory_space<vmem>>, %arg7: memref<32x8xf32, #tpu.memory_space<vmem>>, %arg8: memref<1x8xf32, #tpu.memory_space<vmem>>, %arg9: memref<32x8xf32, #tpu.memory_space<vmem>>, %arg10: memref<1x8xf32, #tpu.memory_space<vmem>>, %arg11: memref<8x8xf32, #tpu.memory_space<vmem>>, %arg12: memref<8x1xf32, #tpu.memory_space<vmem>>, %arg13: memref<8x1xf32, #tpu.memory_space<vmem>>) attributes {dimension_semantics = [#tpu.dimension_semantics<parallel>], iteration_bounds = array<i64: 2>, scalar_prefetch = 0 : i64, scratch_operands = 0 : i64, tpu.core_type = #tpu.core_type<tc>, window_params = [{transform_indices = @transform_0, window_bounds = array<i64: 8, 16>}, {transform_indices = @transform_1, window_bounds = array<i64: 8, 8>}, {pipeline_mode = #tpu.pipeline_mode<synchronous>, transform_indices = @transform_2, window_bounds = array<i64: 16, 32>}, {pipeline_mode = #tpu.pipeline_mode<synchronous>, transform_indices = @transform_3, window_bounds = array<i64: 1, 32>}, {pipeline_mode = #tpu.pipeline_mode<synchronous>, transform_indices = @transform_4, window_bounds = array<i64: 32, 32>}, {pipeline_mode = #tpu.pipeline_mode<synchronous>, transform_indices = @transform_5, window_bounds = array<i64: 1, 32>}, {pipeline_mode = #tpu.pipeline_mode<synchronous>, transform_indices = @transform_6, window_bounds = array<i64: 32, 8>}, {pipeline_mode = #tpu.pipeline_mode<synchronous>, transform_indices = @transform_7, window_bounds = array<i64: 1, 8>}, {pipeline_mode = #tpu.pipeline_mode<synchronous>, transform_indices = @transform_8, window_bounds = array<i64: 32, 8>}, {pipeline_mode = #tpu.pipeline_mode<synchronous>, transform_indices = @transform_9, window_bounds = array<i64: 1, 8>}, {transform_indices = @transform_10, window_bounds = array<i64: 8, 8>}, {transform_indices = @transform_11, window_bounds = array<i64: 8, 1>}, {transform_indices = @transform_12, window_bounds = array<i64: 8, 1>}]} {
    %c0 = arith.constant 0 : index
    %c0_0 = arith.constant 0 : index
    %0 = vector.load %arg1[%c0, %c0_0] : memref<8x16xf32, #tpu.memory_space<vmem>>, vector<8x16xf32>
    %c0_1 = arith.constant 0 : index
    %c0_2 = arith.constant 0 : index
    %1 = vector.load %arg3[%c0_1, %c0_2] : memref<16x32xf32, #tpu.memory_space<vmem>>, vector<16x32xf32>
    %cst = arith.constant dense<0.000000e+00> : vector<8x32xf32>
    %2 = tpu.matmul %0, %1, %cst {dimension_numbers = #tpu.dot_dimension_numbers<[1], [0], [0], [1], [0, 0, 1, 1], [], []>} : vector<8x16xf32>, vector<16x32xf32>, vector<8x32xf32> -> vector<8x32xf32>
    %c0_3 = arith.constant 0 : index
    %c0_4 = arith.constant 0 : index
    %3 = vector.load %arg4[%c0_3, %c0_4] : memref<1x32xf32, #tpu.memory_space<vmem>>, vector<1x32xf32>
    %4 = vector.broadcast %3 : vector<1x32xf32> to vector<8x32xf32>
    %5 = arith.addf %2, %4 : vector<8x32xf32>
    %cst_5 = arith.constant 0.000000e+00 : f32
    %6 = vector.broadcast %cst_5 : f32 to vector<8x32xf32>
    %7 = arith.maximumf %5, %6 : vector<8x32xf32>
    %c0_6 = arith.constant 0 : index
    %c0_7 = arith.constant 0 : index
    %8 = vector.load %arg5[%c0_6, %c0_7] : memref<32x32xf32, #tpu.memory_space<vmem>>, vector<32x32xf32>
    %cst_8 = arith.constant dense<0.000000e+00> : vector<8x32xf32>
    %9 = tpu.matmul %7, %8, %cst_8 {dimension_numbers = #tpu.dot_dimension_numbers<[1], [0], [0], [1], [0, 0, 1, 1], [], []>} : vector<8x32xf32>, vector<32x32xf32>, vector<8x32xf32> -> vector<8x32xf32>
    %c0_9 = arith.constant 0 : index
    %c0_10 = arith.constant 0 : index
    %10 = vector.load %arg6[%c0_9, %c0_10] : memref<1x32xf32, #tpu.memory_space<vmem>>, vector<1x32xf32>
    %11 = vector.broadcast %10 : vector<1x32xf32> to vector<8x32xf32>
    %12 = arith.addf %9, %11 : vector<8x32xf32>
    %c0_11 = arith.constant 0 : index
    %c0_12 = arith.constant 0 : index
    %13 = vector.load %arg7[%c0_11, %c0_12] : memref<32x8xf32, #tpu.memory_space<vmem>>, vector<32x8xf32>
    %cst_13 = arith.constant dense<0.000000e+00> : vector<8x8xf32>
    %14 = tpu.matmul %12, %13, %cst_13 {dimension_numbers = #tpu.dot_dimension_numbers<[1], [0], [0], [1], [0, 0, 1, 1], [], []>} : vector<8x32xf32>, vector<32x8xf32>, vector<8x8xf32> -> vector<8x8xf32>
    %c0_14 = arith.constant 0 : index
    %c0_15 = arith.constant 0 : index
    %15 = vector.load %arg8[%c0_14, %c0_15] : memref<1x8xf32, #tpu.memory_space<vmem>>, vector<1x8xf32>
    %16 = vector.broadcast %15 : vector<1x8xf32> to vector<8x8xf32>
    %17 = arith.addf %14, %16 : vector<8x8xf32>
    %c0_16 = arith.constant 0 : index
    %c0_17 = arith.constant 0 : index
    %18 = vector.load %arg9[%c0_16, %c0_17] : memref<32x8xf32, #tpu.memory_space<vmem>>, vector<32x8xf32>
    %cst_18 = arith.constant dense<0.000000e+00> : vector<8x8xf32>
    %19 = tpu.matmul %12, %18, %cst_18 {dimension_numbers = #tpu.dot_dimension_numbers<[1], [0], [0], [1], [0, 0, 1, 1], [], []>} : vector<8x32xf32>, vector<32x8xf32>, vector<8x8xf32> -> vector<8x8xf32>
    %c0_19 = arith.constant 0 : index
    %c0_20 = arith.constant 0 : index
    %20 = vector.load %arg10[%c0_19, %c0_20] : memref<1x8xf32, #tpu.memory_space<vmem>>, vector<1x8xf32>
    %21 = vector.broadcast %20 : vector<1x8xf32> to vector<8x8xf32>
    %22 = arith.addf %19, %21 : vector<8x8xf32>
    %cst_21 = arith.constant -1.500000e+01 : f32
    %cst_22 = arith.constant 3.000000e+00 : f32
    %23 = vector.broadcast %cst_21 : f32 to vector<8x8xf32>
    %24 = arith.maximumf %23, %22 : vector<8x8xf32>
    %25 = vector.broadcast %cst_22 : f32 to vector<8x8xf32>
    %26 = arith.minimumf %25, %24 : vector<8x8xf32>
    %27 = math.exp %26 : vector<8x8xf32>
    %c0_23 = arith.constant 0 : index
    %c0_24 = arith.constant 0 : index
    %28 = vector.load %arg2[%c0_23, %c0_24] : memref<8x8xf32, #tpu.memory_space<vmem>>, vector<8x8xf32>
    %29 = arith.mulf %27, %28 : vector<8x8xf32>
    %30 = arith.addf %17, %29 : vector<8x8xf32>
    %31 = math.tanh %30 : vector<8x8xf32>
    %c0_25 = arith.constant 0 : index
    %c0_26 = arith.constant 0 : index
    %32 = vector.load %arg11[%c0_25, %c0_26] : memref<8x8xf32, #tpu.memory_space<vmem>>, vector<8x8xf32>
    tpu.vector_store %arg11[%c0_25, %c0_26], %31 {strides = array<i32>} : memref<8x8xf32, #tpu.memory_space<vmem>>, vector<8x8xf32>,
    %33 = arith.mulf %28, %28 : vector<8x8xf32>
    %cst_27 = arith.constant -5.000000e-01 : f32
    %34 = vector.broadcast %cst_27 : f32 to vector<8x8xf32>
    %35 = arith.mulf %34, %33 : vector<8x8xf32>
    %36 = arith.subf %35, %26 : vector<8x8xf32>
    %cst_28 = arith.constant 0.918938517 : f32
    %37 = vector.broadcast %cst_28 : f32 to vector<8x8xf32>
    %38 = arith.subf %36, %37 : vector<8x8xf32>
    %cst_29 = arith.constant dense<0.000000e+00> : vector<8xf32>
    %39 = vector.multi_reduction <add>, %38, %cst_29 [1] : vector<8x8xf32> to vector<8xf32>
    %40 = vector.shape_cast %39 : vector<8xf32> to vector<8x1xf32>
    %c0_30 = arith.constant 0 : index
    %c0_31 = arith.constant 0 : index
    %41 = vector.load %arg12[%c0_30, %c0_31] : memref<8x1xf32, #tpu.memory_space<vmem>>, vector<8x1xf32>
    tpu.vector_store %arg12[%c0_30, %c0_31], %40 {strides = array<i32>} : memref<8x1xf32, #tpu.memory_space<vmem>>, vector<8x1xf32>,
    %cst_32 = arith.constant -2.000000e+00 : f32
    %42 = vector.broadcast %cst_32 : f32 to vector<8x8xf32>
    %43 = arith.mulf %42, %30 : vector<8x8xf32>
    %cst_33 = arith.constant 0.000000e+00 : f32
    %44 = vector.broadcast %cst_33 : f32 to vector<8x8xf32>
    %45 = arith.maximumf %43, %44 : vector<8x8xf32>
    %46 = math.absf %43 : vector<8x8xf32>
    %cst_34 = arith.constant 0.000000e+00 : f32
    %47 = vector.broadcast %cst_34 : f32 to vector<8x8xf32>
    %48 = arith.subf %47, %46 : vector<8x8xf32>
    %49 = math.exp %48 : vector<8x8xf32>
    %50 = math.log1p %49 : vector<8x8xf32>
    %51 = arith.addf %45, %50 : vector<8x8xf32>
    %cst_35 = arith.constant 0.693147182 : f32
    %52 = vector.broadcast %cst_35 : f32 to vector<8x8xf32>
    %53 = arith.subf %52, %30 : vector<8x8xf32>
    %54 = arith.subf %53, %51 : vector<8x8xf32>
    %cst_36 = arith.constant 2.000000e+00 : f32
    %55 = vector.broadcast %cst_36 : f32 to vector<8x8xf32>
    %56 = arith.mulf %55, %54 : vector<8x8xf32>
    %cst_37 = arith.constant dense<0.000000e+00> : vector<8xf32>
    %57 = vector.multi_reduction <add>, %56, %cst_37 [1] : vector<8x8xf32> to vector<8xf32>
    %58 = vector.shape_cast %57 : vector<8xf32> to vector<8x1xf32>
    %c0_38 = arith.constant 0 : index
    %c0_39 = arith.constant 0 : index
    %59 = vector.load %arg13[%c0_38, %c0_39] : memref<8x1xf32, #tpu.memory_space<vmem>>, vector<8x1xf32>
    tpu.vector_store %arg13[%c0_38, %c0_39], %58 {strides = array<i32>} : memref<8x1xf32, #tpu.memory_space<vmem>>, vector<8x1xf32>,
    return
  }
  func.func @transform_0(%arg0: i32) -> (i32, i32) {
    %c0_i32 = arith.constant 0 : i32
    %c0_i32_0 = arith.constant 0 : i32
    return %arg0, %c0_i32 : i32, i32
  }
  func.func @transform_1(%arg0: i32) -> (i32, i32) {
    %c0_i32 = arith.constant 0 : i32
    %c0_i32_0 = arith.constant 0 : i32
    return %arg0, %c0_i32 : i32, i32
  }
  func.func @transform_2(%arg0: i32) -> (i32, i32) {
    %c0_i32 = arith.constant 0 : i32
    %c0_i32_0 = arith.constant 0 : i32
    %c0_i32_1 = arith.constant 0 : i32
    return %c0_i32, %c0_i32_0 : i32, i32
  }
  func.func @transform_3(%arg0: i32) -> (i32, i32) {
    %c0_i32 = arith.constant 0 : i32
    %c0_i32_0 = arith.constant 0 : i32
    %c0_i32_1 = arith.constant 0 : i32
    return %c0_i32, %c0_i32_0 : i32, i32
  }
  func.func @transform_4(%arg0: i32) -> (i32, i32) {
    %c0_i32 = arith.constant 0 : i32
    %c0_i32_0 = arith.constant 0 : i32
    %c0_i32_1 = arith.constant 0 : i32
    return %c0_i32, %c0_i32_0 : i32, i32
  }
  func.func @transform_5(%arg0: i32) -> (i32, i32) {
    %c0_i32 = arith.constant 0 : i32
    %c0_i32_0 = arith.constant 0 : i32
    %c0_i32_1 = arith.constant 0 : i32
    return %c0_i32, %c0_i32_0 : i32, i32
  }
  func.func @transform_6(%arg0: i32) -> (i32, i32) {
    %c0_i32 = arith.constant 0 : i32
    %c0_i32_0 = arith.constant 0 : i32
    %c0_i32_1 = arith.constant 0 : i32
    return %c0_i32, %c0_i32_0 : i32, i32
  }
  func.func @transform_7(%arg0: i32) -> (i32, i32) {
    %c0_i32 = arith.constant 0 : i32
    %c0_i32_0 = arith.constant 0 : i32
    %c0_i32_1 = arith.constant 0 : i32
    return %c0_i32, %c0_i32_0 : i32, i32
  }
  func.func @transform_8(%arg0: i32) -> (i32, i32) {
    %c0_i32 = arith.constant 0 : i32
    %c0_i32_0 = arith.constant 0 : i32
    %c0_i32_1 = arith.constant 0 : i32
    return %c0_i32, %c0_i32_0 : i32, i32
  }
  func.func @transform_9(%arg0: i32) -> (i32, i32) {
    %c0_i32 = arith.constant 0 : i32
    %c0_i32_0 = arith.constant 0 : i32
    %c0_i32_1 = arith.constant 0 : i32
    return %c0_i32, %c0_i32_0 : i32, i32
  }
  func.func @transform_10(%arg0: i32) -> (i32, i32) {
    %c0_i32 = arith.constant 0 : i32
    %c0_i32_0 = arith.constant 0 : i32
    return %arg0, %c0_i32 : i32, i32
  }
  func.func @transform_11(%arg0: i32) -> (i32, i32) {
    %c0_i32 = arith.constant 0 : i32
    %c0_i32_0 = arith.constant 0 : i32
    return %arg0, %c0_i32 : i32, i32
  }
  func.func @transform_12(%arg0: i32) -> (i32, i32) {
    %c0_i32 = arith.constant 0 : i32
    %c0_i32_0 = arith.constant 0 : i32
    return %arg0, %c0_i32 : i32, i32
  }
}

</mosaic_0001>

<llo_original>
// kernel: tpu_custom_call.1
$region0: #{tpu_custom_call.1}
  #allocation0 [shape = 'u32[]', space=smem, size = 0x4, offset = 0x4, fixed_abs, tag = 'smem constant byte address 0x4 - core index']
  #allocation1 [shape = 'u32[144,128]{1,0:T(1,128)}', space=vmem, size = 0x12000, scoped, tag = 'internal scratch']
  %s0 = inlined_call_operand.vmem [shape: f32[16,16], index: 0, kind: input, shape index: {}]
  %s1 = inlined_call_operand.vmem [shape: f32[16,8], index: 1, kind: input, shape index: {}]
  %s2 = inlined_call_operand.vmem [shape: f32[16,32], index: 2, kind: input, shape index: {}]
  %s3 = inlined_call_operand.vmem [shape: f32[1,32], index: 3, kind: input, shape index: {}]
  %s4 = inlined_call_operand.vmem [shape: f32[32,32], index: 4, kind: input, shape index: {}]
  %s5 = inlined_call_operand.vmem [shape: f32[1,32], index: 5, kind: input, shape index: {}]
  %s6 = inlined_call_operand.vmem [shape: f32[32,8], index: 6, kind: input, shape index: {}]
  %s7 = inlined_call_operand.vmem [shape: f32[1,8], index: 7, kind: input, shape index: {}]
  %s8 = inlined_call_operand.vmem [shape: f32[32,8], index: 8, kind: input, shape index: {}]
  %s9 = inlined_call_operand.vmem [shape: f32[1,8], index: 9, kind: input, shape index: {}]
  %s10 = inlined_call_operand.vmem [shape: f32[16,8], index: 10, kind: output, shape index: {0}]
  %s11 = inlined_call_operand.vmem [shape: f32[16,1], index: 11, kind: output, shape index: {1}]
  %s12 = inlined_call_operand.vmem [shape: f32[16,1], index: 12, kind: output, shape index: {2}]
  %13 = xla_tuple %s10, %s11, %s12
  %s14 = sld [smem:[#allocation0]]
  $region89: #{tpu_custom_call.1} parent=0
    _
  %s16 = ssub.s32 1, %s14
  %s17 = scalar_select 0, %s16, %s14
  loop: start=0, step=1, limit=4
  $region2: #{tpu_custom_call.1} parent=0 // loop_pre_header
    _
  $region3: #{tpu_custom_call.1} parent=0 // loop_header
    %s19 = sphi 0, %s23
    %p20 = scmp.ge.s32.totalorder %s19, 4
    %s29 = sphi 0, %s31
    %s32 = sphi 0, %s29
    %s33 = sphi 0, %s32
    %s49 = sphi 0, %s33
    %s55 = sphi 0, %s57
    %s58 = sphi 0, %s55
    %s59 = sphi 0, %s58
    %s75 = sphi 0, %s59
    %s79 = sphi 0, %s79
    %s81 = sphi 0, %s79
    %s82 = sphi 0, %s81
    %s96 = sphi 0, %s82
    %s100 = sphi 0, %s100
    %s102 = sphi 0, %s100
    %s103 = sphi 0, %s102
    %s117 = sphi 0, %s103
    %s121 = sphi 0, %s121
    %s123 = sphi 0, %s121
    %s124 = sphi 0, %s123
    %s138 = sphi 0, %s124
    %s142 = sphi 0, %s142
    %s144 = sphi 0, %s142
    %s145 = sphi 0, %s144
    %s159 = sphi 0, %s145
    %s163 = sphi 0, %s163
    %s165 = sphi 0, %s163
    %s166 = sphi 0, %s165
    %s180 = sphi 0, %s166
    %s184 = sphi 0, %s184
    %s186 = sphi 0, %s184
    %s187 = sphi 0, %s186
    %s201 = sphi 0, %s187
    %s205 = sphi 0, %s205
    %s207 = sphi 0, %s205
    %s208 = sphi 0, %s207
    %s222 = sphi 0, %s208
    %s226 = sphi 0, %s226
    %s228 = sphi 0, %s226
    %s229 = sphi 0, %s228
    %s243 = sphi 0, %s229
    %s249 = sphi 0, %s251
    %s252 = sphi 0, %s249
    %s253 = sphi 0, %s252
    %s269 = sphi 0, %s253
    %s275 = sphi 0, %s277
    %s278 = sphi 0, %s275
    %s279 = sphi 0, %s278
    %s295 = sphi 0, %s279
    %s301 = sphi 0, %s303
    %s304 = sphi 0, %s301
    %s305 = sphi 0, %s304
    %s321 = sphi 0, %s305
  $region4: #{tpu_custom_call.1} parent=0 // loop_header_branch
    %22 = sbr.rel (%p20) target = $region8
  $region5: #{tpu_custom_call.1} parent=0 // loop_body
    %s24 = ssub.s32 %s19, 1
    %s25 = ssub.s32 %s19, 2
    %s26 = sadd.s32 %s19, 1
    %s27 = ssub.s32 %s19, %s26
    %p28 = scmp.eq.s32.totalorder %s27, 0
    %s30 = sadd.s32 %s29, 1
    %s31 = scalar_select %p28, %s29, %s30
    %p34 = pneg %p28
    %p35 = scmp.eq.s32.totalorder %s19, 1
    %p36 = por %p34, %p35
    %p37 = scmp.ne.s32.totalorder %s29, %s32
    %p38 = scmp.eq.s32.totalorder %s19, 0
    %p39 = por %p37, %p38
    %p40 = scmp.ne.s32.totalorder %s29, %s32
    %p41 = scmp.eq.s32.totalorder %s24, 1
    %p42 = por %p40, %p41
    %p43 = scmp.ne.s32.totalorder %s32, %s33
    %p44 = scmp.eq.s32.totalorder %s24, 0
    %p45 = por %p43, %p44
    %p46 = scmp.ne.s32.totalorder %s32, %s33
    %p47 = scmp.eq.s32.totalorder %s25, 1
    %p48 = por %p46, %p47
    %p50 = scmp.ne.s32.totalorder %s33, %s49
    %p51 = scmp.eq.s32.totalorder %s25, 0
    %p52 = por %p50, %p51
    %s53 = ssub.s32 %s19, %s26
    %p54 = scmp.eq.s32.totalorder %s53, 0
    %s56 = sadd.s32 %s55, 1
    %s57 = scalar_select %p54, %s55, %s56
    %p60 = pneg %p54
    %p61 = scmp.eq.s32.totalorder %s19, 1
    %p62 = por %p60, %p61
    %p63 = scmp.ne.s32.totalorder %s55, %s58
    %p64 = scmp.eq.s32.totalorder %s19, 0
    %p65 = por %p63, %p64
    %p66 = scmp.ne.s32.totalorder %s55, %s58
    %p67 = scmp.eq.s32.totalorder %s24, 1
    %p68 = por %p66, %p67
    %p69 = scmp.ne.s32.totalorder %s58, %s59
    %p70 = scmp.eq.s32.totalorder %s24, 0
    %p71 = por %p69, %p70
    %p72 = scmp.ne.s32.totalorder %s58, %s59
    %p73 = scmp.eq.s32.totalorder %s25, 1
    %p74 = por %p72, %p73
    %p76 = scmp.ne.s32.totalorder %s59, %s75
    %p77 = scmp.eq.s32.totalorder %s25, 0
    %p78 = por %p76, %p77
    %s80 = sadd.s32 %s79, 1
    %p83 = scmp.eq.s32.totalorder %s19, 1
    %p84 = scmp.ne.s32.totalorder %s79, %s81
    %p85 = scmp.eq.s32.totalorder %s19, 0
    %p86 = por %p84, %p85
    %p87 = scmp.ne.s32.totalorder %s79, %s81
    %p88 = scmp.eq.s32.totalorder %s24, 1
    %p89 = por %p87, %p88
    %p90 = scmp.ne.s32.totalorder %s81, %s82
    %p91 = scmp.eq.s32.totalorder %s24, 0
    %p92 = por %p90, %p91
    %p93 = scmp.ne.s32.totalorder %s81, %s82
    %p94 = scmp.eq.s32.totalorder %s25, 1
    %p95 = por %p93, %p94
    %p97 = scmp.ne.s32.totalorder %s82, %s96
    %p98 = scmp.eq.s32.totalorder %s25, 0
    %p99 = por %p97, %p98
    %s101 = sadd.s32 %s100, 1
    %p104 = scmp.eq.s32.totalorder %s19, 1
    %p105 = scmp.ne.s32.totalorder %s100, %s102
    %p106 = scmp.eq.s32.totalorder %s19, 0
    %p107 = por %p105, %p106
    %p108 = scmp.ne.s32.totalorder %s100, %s102
    %p109 = scmp.eq.s32.totalorder %s24, 1
    %p110 = por %p108, %p109
    %p111 = scmp.ne.s32.totalorder %s102, %s103
    %p112 = scmp.eq.s32.totalorder %s24, 0
    %p113 = por %p111, %p112
    %p114 = scmp.ne.s32.totalorder %s102, %s103
    %p115 = scmp.eq.s32.totalorder %s25, 1
    %p116 = por %p114, %p115
    %p118 = scmp.ne.s32.totalorder %s103, %s117
    %p119 = scmp.eq.s32.totalorder %s25, 0
    %p120 = por %p118, %p119
    %s122 = sadd.s32 %s121, 1
    %p125 = scmp.eq.s32.totalorder %s19, 1
    %p126 = scmp.ne.s32.totalorder %s121, %s123
    %p127 = scmp.eq.s32.totalorder %s19, 0
    %p128 = por %p126, %p127
    %p129 = scmp.ne.s32.totalorder %s121, %s123
    %p130 = scmp.eq.s32.totalorder %s24, 1
    %p131 = por %p129, %p130
    %p132 = scmp.ne.s32.totalorder %s123, %s124
    %p133 = scmp.eq.s32.totalorder %s24, 0
    %p134 = por %p132, %p133
    %p135 = scmp.ne.s32.totalorder %s123, %s124
    %p136 = scmp.eq.s32.totalorder %s25, 1
    %p137 = por %p135, %p136
    %p139 = scmp.ne.s32.totalorder %s124, %s138
    %p140 = scmp.eq.s32.totalorder %s25, 0
    %p141 = por %p139, %p140
    %s143 = sadd.s32 %s142, 1
    %p146 = scmp.eq.s32.totalorder %s19, 1
    %p147 = scmp.ne.s32.totalorder %s142, %s144
    %p148 = scmp.eq.s32.totalorder %s19, 0
    %p149 = por %p147, %p148
    %p150 = scmp.ne.s32.totalorder %s142, %s144
    %p151 = scmp.eq.s32.totalorder %s24, 1
    %p152 = por %p150, %p151
    %p153 = scmp.ne.s32.totalorder %s144, %s145
    %p154 = scmp.eq.s32.totalorder %s24, 0
    %p155 = por %p153, %p154
    %p156 = scmp.ne.s32.totalorder %s144, %s145
    %p157 = scmp.eq.s32.totalorder %s25, 1
    %p158 = por %p156, %p157
    %p160 = scmp.ne.s32.totalorder %s145, %s159
    %p161 = scmp.eq.s32.totalorder %s25, 0
    %p162 = por %p160, %p161
    %s164 = sadd.s32 %s163, 1
    %p167 = scmp.eq.s32.totalorder %s19, 1
    %p168 = scmp.ne.s32.totalorder %s163, %s165
    %p169 = scmp.eq.s32.totalorder %s19, 0
    %p170 = por %p168, %p169
    %p171 = scmp.ne.s32.totalorder %s163, %s165
    %p172 = scmp.eq.s32.totalorder %s24, 1
    %p173 = por %p171, %p172
    %p174 = scmp.ne.s32.totalorder %s165, %s166
    %p175 = scmp.eq.s32.totalorder %s24, 0
    %p176 = por %p174, %p175
    %p177 = scmp.ne.s32.totalorder %s165, %s166
    %p178 = scmp.eq.s32.totalorder %s25, 1
    %p179 = por %p177, %p178
    %p181 = scmp.ne.s32.totalorder %s166, %s180
    %p182 = scmp.eq.s32.totalorder %s25, 0
    %p183 = por %p181, %p182
    %s185 = sadd.s32 %s184, 1
    %p188 = scmp.eq.s32.totalorder %s19, 1
    %p189 = scmp.ne.s32.totalorder %s184, %s186
    %p190 = scmp.eq.s32.totalorder %s19, 0
    %p191 = por %p189, %p190
    %p192 = scmp.ne.s32.totalorder %s184, %s186
    %p193 = scmp.eq.s32.totalorder %s24, 1
    %p194 = por %p192, %p193
    %p195 = scmp.ne.s32.totalorder %s186, %s187
    %p196 = scmp.eq.s32.totalorder %s24, 0
    %p197 = por %p195, %p196
    %p198 = scmp.ne.s32.totalorder %s186, %s187
    %p199 = scmp.eq.s32.totalorder %s25, 1
    %p200 = por %p198, %p199
    %p202 = scmp.ne.s32.totalorder %s187, %s201
    %p203 = scmp.eq.s32.totalorder %s25, 0
    %p204 = por %p202, %p203
    %s206 = sadd.s32 %s205, 1
    %p209 = scmp.eq.s32.totalorder %s19, 1
    %p210 = scmp.ne.s32.totalorder %s205, %s207
    %p211 = scmp.eq.s32.totalorder %s19, 0
    %p212 = por %p210, %p211
    %p213 = scmp.ne.s32.totalorder %s205, %s207
    %p214 = scmp.eq.s32.totalorder %s24, 1
    %p215 = por %p213, %p214
    %p216 = scmp.ne.s32.totalorder %s207, %s208
    %p217 = scmp.eq.s32.totalorder %s24, 0
    %p218 = por %p216, %p217
    %p219 = scmp.ne.s32.totalorder %s207, %s208
    %p220 = scmp.eq.s32.totalorder %s25, 1
    %p221 = por %p219, %p220
    %p223 = scmp.ne.s32.totalorder %s208, %s222
    %p224 = scmp.eq.s32.totalorder %s25, 0
    %p225 = por %p223, %p224
    %s227 = sadd.s32 %s226, 1
    %p230 = scmp.eq.s32.totalorder %s19, 1
    %p231 = scmp.ne.s32.totalorder %s226, %s228
    %p232 = scmp.eq.s32.totalorder %s19, 0
    %p233 = por %p231, %p232
    %p234 = scmp.ne.s32.totalorder %s226, %s228
    %p235 = scmp.eq.s32.totalorder %s24, 1
    %p236 = por %p234, %p235
    %p237 = scmp.ne.s32.totalorder %s228, %s229
    %p238 = scmp.eq.s32.totalorder %s24, 0
    %p239 = por %p237, %p238
    %p240 = scmp.ne.s32.totalorder %s228, %s229
    %p241 = scmp.eq.s32.totalorder %s25, 1
    %p242 = por %p240, %p241
    %p244 = scmp.ne.s32.totalorder %s229, %s243
    %p245 = scmp.eq.s32.totalorder %s25, 0
    %p246 = por %p244, %p245
    %s247 = ssub.s32 %s19, %s26
    %p248 = scmp.eq.s32.totalorder %s247, 0
    %s250 = sadd.s32 %s249, 1
    %s251 = scalar_select %p248, %s249, %s250
    %p254 = pneg %p248
    %p255 = scmp.eq.s32.totalorder %s19, 1
    %p256 = por %p254, %p255
    %p257 = scmp.ne.s32.totalorder %s249, %s252
    %p258 = scmp.eq.s32.totalorder %s19, 0
    %p259 = por %p257, %p258
    %p260 = scmp.ne.s32.totalorder %s249, %s252
    %p261 = scmp.eq.s32.totalorder %s24, 1
    %p262 = por %p260, %p261
    %p263 = scmp.ne.s32.totalorder %s252, %s253
    %p264 = scmp.eq.s32.totalorder %s24, 0
    %p265 = por %p263, %p264
    %p266 = scmp.ne.s32.totalorder %s252, %s253
    %p267 = scmp.eq.s32.totalorder %s25, 1
    %p268 = por %p266, %p267
    %p270 = scmp.ne.s32.totalorder %s253, %s269
    %p271 = scmp.eq.s32.totalorder %s25, 0
    %p272 = por %p270, %p271
    %s273 = ssub.s32 %s19, %s26
    %p274 = scmp.eq.s32.totalorder %s273, 0
    %s276 = sadd.s32 %s275, 1
    %s277 = scalar_select %p274, %s275, %s276
    %p280 = pneg %p274
    %p281 = scmp.eq.s32.totalorder %s19, 1
    %p282 = por %p280, %p281
    %p283 = scmp.ne.s32.totalorder %s275, %s278
    %p284 = scmp.eq.s32.totalorder %s19, 0
    %p285 = por %p283, %p284
    %p286 = scmp.ne.s32.totalorder %s275, %s278
    %p287 = scmp.eq.s32.totalorder %s24, 1
    %p288 = por %p286, %p287
    %p289 = scmp.ne.s32.totalorder %s278, %s279
    %p290 = scmp.eq.s32.totalorder %s24, 0
    %p291 = por %p289, %p290
    %p292 = scmp.ne.s32.totalorder %s278, %s279
    %p293 = scmp.eq.s32.totalorder %s25, 1
    %p294 = por %p292, %p293
    %p296 = scmp.ne.s32.totalorder %s279, %s295
    %p297 = scmp.eq.s32.totalorder %s25, 0
    %p298 = por %p296, %p297
    %s299 = ssub.s32 %s19, %s26
    %p300 = scmp.eq.s32.totalorder %s299, 0
    %s302 = sadd.s32 %s301, 1
    %s303 = scalar_select %p300, %s301, %s302
    %p306 = pneg %p300
    %p307 = scmp.eq.s32.totalorder %s19, 1
    %p308 = por %p306, %p307
    %p309 = scmp.ne.s32.totalorder %s301, %s304
    %p310 = scmp.eq.s32.totalorder %s19, 0
    %p311 = por %p309, %p310
    %p312 = scmp.ne.s32.totalorder %s301, %s304
    %p313 = scmp.eq.s32.totalorder %s24, 1
    %p314 = por %p312, %p313
    %p315 = scmp.ne.s32.totalorder %s304, %s305
    %p316 = scmp.eq.s32.totalorder %s24, 0
    %p317 = por %p315, %p316
    %p318 = scmp.ne.s32.totalorder %s304, %s305
    %p319 = scmp.eq.s32.totalorder %s25, 1
    %p320 = por %p318, %p319
    %p322 = scmp.ne.s32.totalorder %s305, %s321
    %p323 = scmp.eq.s32.totalorder %s25, 0
    %p324 = por %p322, %p323
    %p325 = scmp.le.s32.totalorder 1, %s19
    %p326 = scmp.lt.s32.totalorder %s19, 3
    %p327 = pnand %p325, %p326
    %p328 = pneg %p327
    // Predicated region
    $region9: #{tpu_custom_call.1} parent=5 // pred_check
      _
    $region10: #{tpu_custom_call.1} parent=5 // pred_check_branch
      %330 = sbr.rel (%p327) target = $region12
    $region11: #{tpu_custom_call.1} parent=5 // pred_region
      %s331 = ssub.s32 %s19, 1
      // Predicated region
      $region13: #{tpu_custom_call.1} parent=11 // pred_check
        %p332 = pneg %p92
      $region14: #{tpu_custom_call.1} parent=11 // pred_check_branch
        %334 = sbr.rel (%p332) target = $region16
      $region15: #{tpu_custom_call.1} parent=11 // pred_region
        _
      $region16: #{tpu_custom_call.1} parent=11 // pred_fallthru
        _
      // Predicated region
      $region17: #{tpu_custom_call.1} parent=11 // pred_check
        %p335 = pneg %p113
      $region18: #{tpu_custom_call.1} parent=11 // pred_check_branch
        %337 = sbr.rel (%p335) target = $region20
      $region19: #{tpu_custom_call.1} parent=11 // pred_region
        _
      $region20: #{tpu_custom_call.1} parent=11 // pred_fallthru
        _
      // Predicated region
      $region21: #{tpu_custom_call.1} parent=11 // pred_check
        %p338 = pneg %p134
      $region22: #{tpu_custom_call.1} parent=11 // pred_check_branch
        %340 = sbr.rel (%p338) target = $region24
      $region23: #{tpu_custom_call.1} parent=11 // pred_region
        _
      $region24: #{tpu_custom_call.1} parent=11 // pred_fallthru
        _
      // Predicated region
      $region25: #{tpu_custom_call.1} parent=11 // pred_check
        %p341 = pneg %p155
      $region26: #{tpu_custom_call.1} parent=11 // pred_check_branch
        %343 = sbr.rel (%p341) target = $region28
      $region27: #{tpu_custom_call.1} parent=11 // pred_region
        _
      $region28: #{tpu_custom_call.1} parent=11 // pred_fallthru
        _
      // Predicated region
      $region29: #{tpu_custom_call.1} parent=11 // pred_check
        %p344 = pneg %p176
      $region30: #{tpu_custom_call.1} parent=11 // pred_check_branch
        %346 = sbr.rel (%p344) target = $region32
      $region31: #{tpu_custom_call.1} parent=11 // pred_region
        _
      $region32: #{tpu_custom_call.1} parent=11 // pred_fallthru
        _
      // Predicated region
      $region33: #{tpu_custom_call.1} parent=11 // pred_check
        %p347 = pneg %p197
      $region34: #{tpu_custom_call.1} parent=11 // pred_check_branch
        %349 = sbr.rel (%p347) target = $region36
      $region35: #{tpu_custom_call.1} parent=11 // pred_region
        _
      $region36: #{tpu_custom_call.1} parent=11 // pred_fallthru
        _
      // Predicated region
      $region37: #{tpu_custom_call.1} parent=11 // pred_check
        %p350 = pneg %p218
      $region38: #{tpu_custom_call.1} parent=11 // pred_check_branch
        %352 = sbr.rel (%p350) target = $region40
      $region39: #{tpu_custom_call.1} parent=11 // pred_region
        _
      $region40: #{tpu_custom_call.1} parent=11 // pred_fallthru
        _
      // Predicated region
      $region41: #{tpu_custom_call.1} parent=11 // pred_check
        %p353 = pneg %p239
      $region42: #{tpu_custom_call.1} parent=11 // pred_check_branch
        %355 = sbr.rel (%p353) target = $region44
      $region43: #{tpu_custom_call.1} parent=11 // pred_region
        _
      $region44: #{tpu_custom_call.1} parent=11 // pred_fallthru
        _
    $region12: #{tpu_custom_call.1} parent=5 // pred_fallthru
      _
    %p356 = scmp.lt.s32.totalorder %s19, 2
    // Predicated region
    $region45: #{tpu_custom_call.1} parent=5 // pred_check
      %p357 = pneg %p356
    $region46: #{tpu_custom_call.1} parent=5 // pred_check_branch
      %359 = sbr.rel (%p357) target = $region48
    $region47: #{tpu_custom_call.1} parent=5 // pred_region
      // Predicated region
      $region49: #{tpu_custom_call.1} parent=47 // pred_check
        %p360 = pneg %p39
      $region50: #{tpu_custom_call.1} parent=47 // pred_check_branch
        %362 = sbr.rel (%p360) target = $region52
      $region51: #{tpu_custom_call.1} parent=47 // pred_region
        %p363 = scmp.lt.s32.totalorder %s19, 1
        %s364 = scalar_select %p363, %s19, 1
        %s365 = smul.addr %s364, 8
        %s366 = scalar_lea.vmem %s0, %s365
      $region52: #{tpu_custom_call.1} parent=47 // pred_fallthru
        _
      // Predicated region
      $region53: #{tpu_custom_call.1} parent=47 // pred_check
        %p367 = pneg %p65
      $region54: #{tpu_custom_call.1} parent=47 // pred_check_branch
        %369 = sbr.rel (%p367) target = $region56
      $region55: #{tpu_custom_call.1} parent=47 // pred_region
        %p370 = scmp.lt.s32.totalorder %s19, 1
        %s371 = scalar_select %p370, %s19, 1
        %s372 = smul.addr %s371, 8
        %s373 = scalar_lea.vmem %s1, %s372
      $region56: #{tpu_custom_call.1} parent=47 // pred_fallthru
        _
    $region48: #{tpu_custom_call.1} parent=5 // pred_fallthru
      _
    %p374 = scmp.le.s32.totalorder 1, %s19
    %p375 = scmp.lt.s32.totalorder %s19, 3
    %p376 = pnand %p374, %p375
    %p377 = pneg %p376
    // Predicated region
    $region57: #{tpu_custom_call.1} parent=5 // pred_check
      _
    $region58: #{tpu_custom_call.1} parent=5 // pred_check_branch
      %379 = sbr.rel (%p376) target = $region60
    $region59: #{tpu_custom_call.1} parent=5 // pred_region
      %s380 = ssub.s32 %s19, 1
      %p381 = scmp.lt.s32.totalorder %s24, 1
      %s382 = scalar_select %p381, %s24, 1
      %s383 = smul.addr %s382, 8
      %s384 = scalar_lea.vmem %s0, %s383
      %p385 = pneg %p45
      %p386 = pneg %p42
      %p387 = scmp.lt.s32.totalorder %s24, 1
      %s388 = scalar_select %p387, %s24, 1
      %s389 = smul.addr %s388, 8
      %s390 = scalar_lea.vmem %s1, %s389
      %p391 = pneg %p71
      %p392 = pneg %p68
      %p393 = pneg %p92
      %p394 = pneg %p89
      %p395 = pneg %p113
      %p396 = pneg %p110
      %p397 = pneg %p134
      %p398 = pneg %p131
      %p399 = pneg %p155
      %p400 = pneg %p152
      %p401 = pneg %p176
      %p402 = pneg %p173
      %p403 = pneg %p197
      %p404 = pneg %p194
      %p405 = pneg %p218
      %p406 = pneg %p215
      %p407 = pneg %p239
      %p408 = pneg %p236
      %p409 = pneg %p265
      %p410 = pneg %p262
      %p411 = scmp.lt.s32.totalorder %s24, 1
      %s412 = scalar_select %p411, %s24, 1
      %s413 = smul.addr %s412, 8
      %s414 = scalar_lea.vmem %s10, %s413
      %p415 = pneg %p291
      %p416 = pneg %p288
      %p417 = scmp.lt.s32.totalorder %s24, 1
      %s418 = scalar_select %p417, %s24, 1
      %s419 = smul.addr %s418, 8
      %s420 = scalar_lea.vmem %s11, %s419
      %p421 = pneg %p317
      %p422 = pneg %p314
      %p423 = scmp.lt.s32.totalorder %s24, 1
      %s424 = scalar_select %p423, %s24, 1
      %s425 = smul.addr %s424, 8
      %s426 = scalar_lea.vmem %s12, %s425
      %p427 = scmp.lt.s32.totalorder %s24, 1
      %s428 = scalar_select %p427, %s24, 1
      %s429 = smul.addr %s428, 8
      %s430 = scalar_lea.vmem %s0, %s429
      %p431 = scmp.lt.s32.totalorder %s24, 1
      %s432 = scalar_select %p431, %s24, 1
      %s433 = smul.addr %s432, 8
      %s434 = scalar_lea.vmem %s1, %s433
      %p435 = scmp.lt.s32.totalorder %s24, 1
      %s436 = scalar_select %p435, %s24, 1
      %s437 = smul.addr %s436, 8
      %s438 = scalar_lea.vmem %s10, %s437
      %p439 = scmp.lt.s32.totalorder %s24, 1
      %s440 = scalar_select %p439, %s24, 1
      %s441 = smul.addr %s440, 8
      %s442 = scalar_lea.vmem %s11, %s441
      %p443 = scmp.lt.s32.totalorder %s24, 1
      %s444 = scalar_select %p443, %s24, 1
      %s445 = smul.addr %s444, 8
      %s446 = scalar_lea.vmem %s12, %s445
      %v447 = vld [vmem:[%s430] sm:$0xff]
      %v448 = vld [vmem:[%s2] sm:$0xff]
      %v449 = vld [vmem:[%s2 + $0x8] sm:$0xff]
      %v450 = vld [vmem:[%s3] sm:$0x1]
      %v452 = vlaneseq
      %v453 = vshrl.u32 %v452, 7
      %v454 = vsub.s32 0, %v453
      %v455 = vrot.slane %v450, %v454
      %vm457 = vcmask 130048
      %v459 = vsel %vm457, %v447, 0
      %461 = vmatprep.subr.mxu0 0.0
      %462 = vmatpush1.msra.mxu0 %v448
      %463 = vmatprep.subr.mxu0 0.0
      %464 = vmatpush1.msra.mxu0 %v449
      %465 = vmatprep.subr.mxu0 0.0
      %466 = vmatpush1.msra.mxu0 0.0
      %467 = vmatprep.subr.mxu0 0.0
      %468 = vmatpush1.msra.mxu0 0.0
      %469 = vmatprep.subr.mxu0 0.0
      %470 = vmatpush1.msra.mxu0 0.0
      %471 = vmatprep.subr.mxu0 0.0
      %472 = vmatpush1.msra.mxu0 0.0
      %473 = vmatprep.subr.mxu0 0.0
      %474 = vmatpush1.msra.mxu0 0.0
      %475 = vmatprep.subr.mxu0 0.0
      %476 = vmatpush1.msra.mxu0 0.0
      %477 = vmatprep.subr.mxu0 0.0
      %478 = vmatpush1.msra.mxu0 0.0
      %479 = vmatprep.subr.mxu0 0.0
      %480 = vmatpush1.msra.mxu0 0.0
      %481 = vmatprep.subr.mxu0 0.0
      %482 = vmatpush1.msra.mxu0 0.0
      %483 = vmatprep.subr.mxu0 0.0
      %484 = vmatpush1.msra.mxu0 0.0
      %485 = vmatprep.subr.mxu0 0.0
      %486 = vmatpush1.msra.mxu0 0.0
      %487 = vmatprep.subr.mxu0 0.0
      %488 = vmatpush1.msra.mxu0 0.0
      %489 = vmatprep.subr.mxu0 0.0
      %490 = vmatpush1.msra.mxu0 0.0
      %491 = vmatprep.subr.mxu0 0.0
      %492 = vmatpush1.msra.mxu0 0.0
      %493 = vmatprep.subr.mxu0 0.0
      %494 = vmatpush1.msra.mxu0 0.0
      %495 = vmatprep.subr.mxu0 0.0
      %496 = vmatpush1.msra.mxu0 0.0
      %497 = vmatprep.subr.mxu0 0.0
      %498 = vmatpush1.msra.mxu0 0.0
      %499 = vmatprep.subr.mxu0 0.0
      %500 = vmatpush1.msra.mxu0 0.0
      %501 = vmatprep.subr.mxu0 0.0
      %502 = vmatpush1.msra.mxu0 0.0
      %503 = vmatprep.subr.mxu0 0.0
      %504 = vmatpush1.msra.mxu0 0.0
      %505 = vmatprep.subr.mxu0 0.0
      %506 = vmatpush1.msra.mxu0 0.0
      %507 = vmatprep.subr.mxu0 0.0
      %508 = vmatpush1.msra.mxu0 0.0
      %509 = vmatprep.subr.mxu0 0.0
      %510 = vmatpush1.msra.mxu0 0.0
      %511 = vmatprep.subr.mxu0 0.0
      %512 = vmatpush1.msra.mxu0 0.0
      %513 = vmatprep.subr.mxu0 0.0
      %514 = vmatpush1.msra.mxu0 0.0
      %515 = vmatprep.subr.mxu0 0.0
      %516 = vmatpush1.msra.mxu0 0.0
      %517 = vmatprep.subr.mxu0 0.0
      %518 = vmatpush1.msra.mxu0 0.0
      %519 = vmatprep.subr.mxu0 0.0
      %520 = vmatpush1.msra.mxu0 0.0
      %521 = vmatprep.subr.mxu0 0.0
      %522 = vmatpush1.msra.mxu0 0.0
      %523 = vmatprep.subr.mxu0 0.0
      %524 = vmatpush1.msra.mxu0 0.0
      %525 = vmatprep.mubr.f32.mxu0 0.0
      %526 = vmatmul.mubr.f32.gmra.mrb[0].mxu0 %v459
      %v527 = vpop.f32.mrb[0].mxu0
      %v528 = vadd.f32 %v455, %v527
      %v529 = vpop.f32.mrb[0].mxu0
      %530 = vdwg.mxu0
      %v531 = vmax.f32 %v528, 0.0
      %v532 = vld [vmem:[%s4] sm:$0xff]
      %v533 = vld [vmem:[%s4 + $0x8] sm:$0xff]
      %v534 = vld [vmem:[%s4 + $0x10] sm:$0xff]
      %v535 = vld [vmem:[%s4 + $0x18] sm:$0xff]
      %v536 = vld [vmem:[%s5] sm:$0x1]
      %v538 = vlaneseq
      %v539 = vshrl.u32 %v538, 7
      %v540 = vsub.s32 0, %v539
      %v541 = vrot.slane %v536, %v540
      %vm543 = vcmask 261120
      %v545 = vsel %vm543, %v531, 0
      %547 = vmatprep.subr.mxu0 0.0
      %548 = vmatpush1.msra.mxu0 %v532
      %549 = vmatprep.subr.mxu0 0.0
      %550 = vmatpush1.msra.mxu0 %v533
      %551 = vmatprep.subr.mxu0 0.0
      %552 = vmatpush1.msra.mxu0 %v534
      %553 = vmatprep.subr.mxu0 0.0
      %554 = vmatpush1.msra.mxu0 %v535
      %555 = vmatprep.subr.mxu0 0.0
      %556 = vmatpush1.msra.mxu0 0.0
      %557 = vmatprep.subr.mxu0 0.0
      %558 = vmatpush1.msra.mxu0 0.0
      %559 = vmatprep.subr.mxu0 0.0
      %560 = vmatpush1.msra.mxu0 0.0
      %561 = vmatprep.subr.mxu0 0.0
      %562 = vmatpush1.msra.mxu0 0.0
      %563 = vmatprep.subr.mxu0 0.0
      %564 = vmatpush1.msra.mxu0 0.0
      %565 = vmatprep.subr.mxu0 0.0
      %566 = vmatpush1.msra.mxu0 0.0
      %567 = vmatprep.subr.mxu0 0.0
      %568 = vmatpush1.msra.mxu0 0.0
      %569 = vmatprep.subr.mxu0 0.0
      %570 = vmatpush1.msra.mxu0 0.0
      %571 = vmatprep.subr.mxu0 0.0
      %572 = vmatpush1.msra.mxu0 0.0
      %573 = vmatprep.subr.mxu0 0.0
      %574 = vmatpush1.msra.mxu0 0.0
      %575 = vmatprep.subr.mxu0 0.0
      %576 = vmatpush1.msra.mxu0 0.0
      %577 = vmatprep.subr.mxu0 0.0
      %578 = vmatpush1.msra.mxu0 0.0
      %579 = vmatprep.subr.mxu0 0.0
      %580 = vmatpush1.msra.mxu0 0.0
      %581 = vmatprep.subr.mxu0 0.0
      %582 = vmatpush1.msra.mxu0 0.0
      %583 = vmatprep.subr.mxu0 0.0
      %584 = vmatpush1.msra.mxu0 0.0
      %585 = vmatprep.subr.mxu0 0.0
      %586 = vmatpush1.msra.mxu0 0.0
      %587 = vmatprep.subr.mxu0 0.0
      %588 = vmatpush1.msra.mxu0 0.0
      %589 = vmatprep.subr.mxu0 0.0
      %590 = vmatpush1.msra.mxu0 0.0
      %591 = vmatprep.subr.mxu0 0.0
      %592 = vmatpush1.msra.mxu0 0.0
      %593 = vmatprep.subr.mxu0 0.0
      %594 = vmatpush1.msra.mxu0 0.0
      %595 = vmatprep.subr.mxu0 0.0
      %596 = vmatpush1.msra.mxu0 0.0
      %597 = vmatprep.subr.mxu0 0.0
      %598 = vmatpush1.msra.mxu0 0.0
      %599 = vmatprep.subr.mxu0 0.0
      %600 = vmatpush1.msra.mxu0 0.0
      %601 = vmatprep.subr.mxu0 0.0
      %602 = vmatpush1.msra.mxu0 0.0
      %603 = vmatprep.subr.mxu0 0.0
      %604 = vmatpush1.msra.mxu0 0.0
      %605 = vmatprep.subr.mxu0 0.0
      %606 = vmatpush1.msra.mxu0 0.0
      %607 = vmatprep.subr.mxu0 0.0
      %608 = vmatpush1.msra.mxu0 0.0
      %609 = vmatprep.subr.mxu0 0.0
      %610 = vmatpush1.msra.mxu0 0.0
      %611 = vmatprep.mubr.f32.mxu0 0.0
      %612 = vmatmul.mubr.f32.gmra.mrb[0].mxu0 %v545
      %v613 = vpop.f32.mrb[0].mxu0
      %v614 = vadd.f32 %v541, %v613
      %v615 = vpop.f32.mrb[0].mxu0
      %616 = vdwg.mxu0
      %v617 = vld [vmem:[%s6] sm:$0xff]
      %v618 = vld [vmem:[%s6 + $0x8] sm:$0xff]
      %v619 = vld [vmem:[%s6 + $0x10] sm:$0xff]
      %v620 = vld [vmem:[%s6 + $0x18] sm:$0xff]
      %v621 = vld [vmem:[%s7] sm:$0x1]
      %v623 = vlaneseq
      %v624 = vshrl.u32 %v623, 7
      %v625 = vsub.s32 0, %v624
      %v626 = vrot.slane %v621, %v625
      %v629 = vsel %vm543, %v614, 0
      %631 = vmatprep.subr.mxu0 0.0
      %632 = vmatpush1.msra.mxu0 %v617
      %633 = vmatprep.subr.mxu0 0.0
      %634 = vmatpush1.msra.mxu0 %v618
      %635 = vmatprep.subr.mxu0 0.0
      %636 = vmatpush1.msra.mxu0 %v619
      %637 = vmatprep.subr.mxu0 0.0
      %638 = vmatpush1.msra.mxu0 %v620
      %639 = vmatprep.subr.mxu0 0.0
      %640 = vmatpush1.msra.mxu0 0.0
      %641 = vmatprep.subr.mxu0 0.0
      %642 = vmatpush1.msra.mxu0 0.0
      %643 = vmatprep.subr.mxu0 0.0
      %644 = vmatpush1.msra.mxu0 0.0
      %645 = vmatprep.subr.mxu0 0.0
      %646 = vmatpush1.msra.mxu0 0.0
      %647 = vmatprep.subr.mxu0 0.0
      %648 = vmatpush1.msra.mxu0 0.0
      %649 = vmatprep.subr.mxu0 0.0
      %650 = vmatpush1.msra.mxu0 0.0
      %651 = vmatprep.subr.mxu0 0.0
      %652 = vmatpush1.msra.mxu0 0.0
      %653 = vmatprep.subr.mxu0 0.0
      %654 = vmatpush1.msra.mxu0 0.0
      %655 = vmatprep.subr.mxu0 0.0
      %656 = vmatpush1.msra.mxu0 0.0
      %657 = vmatprep.subr.mxu0 0.0
      %658 = vmatpush1.msra.mxu0 0.0
      %659 = vmatprep.subr.mxu0 0.0
      %660 = vmatpush1.msra.mxu0 0.0
      %661 = vmatprep.subr.mxu0 0.0
      %662 = vmatpush1.msra.mxu0 0.0
      %663 = vmatprep.subr.mxu0 0.0
      %664 = vmatpush1.msra.mxu0 0.0
      %665 = vmatprep.subr.mxu0 0.0
      %666 = vmatpush1.msra.mxu0 0.0
      %667 = vmatprep.subr.mxu0 0.0
      %668 = vmatpush1.msra.mxu0 0.0
      %669 = vmatprep.subr.mxu0 0.0
      %670 = vmatpush1.msra.mxu0 0.0
      %671 = vmatprep.subr.mxu0 0.0
      %672 = vmatpush1.msra.mxu0 0.0
      %673 = vmatprep.subr.mxu0 0.0
      %674 = vmatpush1.msra.mxu0 0.0
      %675 = vmatprep.subr.mxu0 0.0
      %676 = vmatpush1.msra.mxu0 0.0
      %677 = vmatprep.subr.mxu0 0.0
      %678 = vmatpush1.msra.mxu0 0.0
      %679 = vmatprep.subr.mxu0 0.0
      %680 = vmatpush1.msra.mxu0 0.0
      %681 = vmatprep.subr.mxu0 0.0
      %682 = vmatpush1.msra.mxu0 0.0
      %683 = vmatprep.subr.mxu0 0.0
      %684 = vmatpush1.msra.mxu0 0.0
      %685 = vmatprep.subr.mxu0 0.0
      %686 = vmatpush1.msra.mxu0 0.0
      %687 = vmatprep.subr.mxu0 0.0
      %688 = vmatpush1.msra.mxu0 0.0
      %689 = vmatprep.subr.mxu0 0.0
      %690 = vmatpush1.msra.mxu0 0.0
      %691 = vmatprep.subr.mxu0 0.0
      %692 = vmatpush1.msra.mxu0 0.0
      %693 = vmatprep.subr.mxu0 0.0
      %694 = vmatpush1.msra.mxu0 0.0
      %695 = vmatprep.mubr.f32.mxu0 0.0
      %696 = vmatmul.mubr.f32.gmra.mrb[0].mxu0 %v629
      %v697 = vpop.f32.mrb[0].mxu0
      %v698 = vadd.f32 %v626, %v697
      %v699 = vpop.f32.mrb[0].mxu0
      %700 = vdwg.mxu0
      %v701 = vld [vmem:[%s8] sm:$0xff]
      %v702 = vld [vmem:[%s8 + $0x8] sm:$0xff]
      %v703 = vld [vmem:[%s8 + $0x10] sm:$0xff]
      %v704 = vld [vmem:[%s8 + $0x18] sm:$0xff]
      %v705 = vld [vmem:[%s9] sm:$0x1]
      %v707 = vlaneseq
      %v708 = vshrl.u32 %v707, 7
      %v709 = vsub.s32 0, %v708
      %v710 = vrot.slane %v705, %v709
      %712 = vmatprep.subr.mxu0 0.0
      %713 = vmatpush1.msra.mxu0 %v701
      %714 = vmatprep.subr.mxu0 0.0
      %715 = vmatpush1.msra.mxu0 %v702
      %716 = vmatprep.subr.mxu0 0.0
      %717 = vmatpush1.msra.mxu0 %v703
      %718 = vmatprep.subr.mxu0 0.0
      %719 = vmatpush1.msra.mxu0 %v704
      %720 = vmatprep.subr.mxu0 0.0
      %721 = vmatpush1.msra.mxu0 0.0
      %722 = vmatprep.subr.mxu0 0.0
      %723 = vmatpush1.msra.mxu0 0.0
      %724 = vmatprep.subr.mxu0 0.0
      %725 = vmatpush1.msra.mxu0 0.0
      %726 = vmatprep.subr.mxu0 0.0
      %727 = vmatpush1.msra.mxu0 0.0
      %728 = vmatprep.subr.mxu0 0.0
      %729 = vmatpush1.msra.mxu0 0.0
      %730 = vmatprep.subr.mxu0 0.0
      %731 = vmatpush1.msra.mxu0 0.0
      %732 = vmatprep.subr.mxu0 0.0
      %733 = vmatpush1.msra.mxu0 0.0
      %734 = vmatprep.subr.mxu0 0.0
      %735 = vmatpush1.msra.mxu0 0.0
      %736 = vmatprep.subr.mxu0 0.0
      %737 = vmatpush1.msra.mxu0 0.0
      %738 = vmatprep.subr.mxu0 0.0
      %739 = vmatpush1.msra.mxu0 0.0
      %740 = vmatprep.subr.mxu0 0.0
      %741 = vmatpush1.msra.mxu0 0.0
      %742 = vmatprep.subr.mxu0 0.0
      %743 = vmatpush1.msra.mxu0 0.0
      %744 = vmatprep.subr.mxu0 0.0
      %745 = vmatpush1.msra.mxu0 0.0
      %746 = vmatprep.subr.mxu0 0.0
      %747 = vmatpush1.msra.mxu0 0.0
      %748 = vmatprep.subr.mxu0 0.0
      %749 = vmatpush1.msra.mxu0 0.0
      %750 = vmatprep.subr.mxu0 0.0
      %751 = vmatpush1.msra.mxu0 0.0
      %752 = vmatprep.subr.mxu0 0.0
      %753 = vmatpush1.msra.mxu0 0.0
      %754 = vmatprep.subr.mxu0 0.0
      %755 = vmatpush1.msra.mxu0 0.0
      %756 = vmatprep.subr.mxu0 0.0
      %757 = vmatpush1.msra.mxu0 0.0
      %758 = vmatprep.subr.mxu0 0.0
      %759 = vmatpush1.msra.mxu0 0.0
      %760 = vmatprep.subr.mxu0 0.0
      %761 = vmatpush1.msra.mxu0 0.0
      %762 = vmatprep.subr.mxu0 0.0
      %763 = vmatpush1.msra.mxu0 0.0
      %764 = vmatprep.subr.mxu0 0.0
      %765 = vmatpush1.msra.mxu0 0.0
      %766 = vmatprep.subr.mxu0 0.0
      %767 = vmatpush1.msra.mxu0 0.0
      %768 = vmatprep.subr.mxu0 0.0
      %769 = vmatpush1.msra.mxu0 0.0
      %770 = vmatprep.subr.mxu0 0.0
      %771 = vmatpush1.msra.mxu0 0.0
      %772 = vmatprep.subr.mxu0 0.0
      %773 = vmatpush1.msra.mxu0 0.0
      %774 = vmatprep.subr.mxu0 0.0
      %775 = vmatpush1.msra.mxu0 0.0
      %776 = vmatprep.mubr.f32.mxu0 0.0
      %777 = vmatmul.mubr.f32.gmra.mrb[0].mxu0 %v629
      %v778 = vpop.f32.mrb[0].mxu0
      %v779 = vadd.f32 %v710, %v778
      %v780 = vpop.f32.mrb[0].mxu0
      %781 = vdwg.mxu0
      %v782 = vmax.f32 %v779, -15.0
      %v783 = vmin.f32 %v782, 3.0
      %v784 = vmul.f32 %v783, 1.442695
      %v785 = vpow.pop %v784
      %v786 = vld [vmem:[%s434] sm:$0xff]
      %v787 = vmul.f32 %v785, %v786
      %v788 = vadd.f32 %v698, %v787
      %v789 = vtanh.pop %v788
      %vm790 = vcmask 64512
      %791 = vst.msk [vmem:[%s438] sm:$0xff] %vm790, %v789
      %v792 = vmul.f32 %v786, %v786
      %v793 = vmul.f32 %v792, -0.5
      %v794 = vsub.f32 %v793, %v783
      %v795 = vsub.f32 %v794, 0.9189385
      %v796 = vsel %vm790, %v795, 0.0
      %797 = vadd.xlane.f32.xlu0 %v796
      %v798 = vpop.xlane.xlu0 %797
      %vm799 = vcmask 7168
      %800 = vst.msk [vmem:[%s442] sm:$0xff] %vm799, %v798
      %v801 = vmul.f32 %v788, -2.0
      %v802 = vmax.f32 %v801, 0.0
      %v803 = vand.u32 2147483647, %v801
      %v804 = vsub.f32 0.0, %v803
      %v805 = vmul.f32 %v804, 1.442695
      %v806 = vpow.pop %v805
      %v807 = vadd.f32 %v806, 1.0
      %v808 = vlog2.pop %v807
      %v809 = vmul.f32 %v808, 0.6931472
      %v810 = vmul.f32 -0.5, %v806
      %v811 = vadd.f32 %v810, 1.0
      %v812 = vmul.f32 %v811, %v806
      %v813 = vand.u32 2147483647, %v806
      %vm814 = vcmp.lt.f32.partialorder %v813, 0.0004427343
      %v815 = vsel %vm814, %v812, %v809
      %v816 = vadd.f32 %v802, %v815
      %v817 = vsub.f32 0.6931472, %v788
      %v818 = vsub.f32 %v817, %v816
      %v819 = vmul.f32 %v818, 2.0
      %v820 = vsel %vm790, %v819, 0.0
      %821 = vadd.xlane.f32.xlu0 %v820
      %v822 = vpop.xlane.xlu0 %821
      %823 = vst.msk [vmem:[%s446] sm:$0xff] %vm799, %v822
      %p824 = scmp.lt.s32.totalorder %s24, 1
      %s825 = scalar_select %p824, %s24, 1
      %s826 = smul.addr %s825, 8
      %s827 = scalar_lea.vmem %s10, %s826
      %p828 = scmp.lt.s32.totalorder %s24, 1
      %s829 = scalar_select %p828, %s24, 1
      %s830 = smul.addr %s829, 8
      %s831 = scalar_lea.vmem %s11, %s830
      %p832 = scmp.lt.s32.totalorder %s24, 1
      %s833 = scalar_select %p832, %s24, 1
      %s834 = smul.addr %s833, 8
      %s835 = scalar_lea.vmem %s12, %s834
      // Predicated region
      $region61: #{tpu_custom_call.1} parent=59 // pred_check
        %p836 = pneg %p262
      $region62: #{tpu_custom_call.1} parent=59 // pred_check_branch
        %838 = sbr.rel (%p836) target = $region64
      $region63: #{tpu_custom_call.1} parent=59 // pred_region
        _
      $region64: #{tpu_custom_call.1} parent=59 // pred_fallthru
        _
      // Predicated region
      $region65: #{tpu_custom_call.1} parent=59 // pred_check
        %p839 = pneg %p288
      $region66: #{tpu_custom_call.1} parent=59 // pred_check_branch
        %841 = sbr.rel (%p839) target = $region68
      $region67: #{tpu_custom_call.1} parent=59 // pred_region
        _
      $region68: #{tpu_custom_call.1} parent=59 // pred_fallthru
        _
      // Predicated region
      $region69: #{tpu_custom_call.1} parent=59 // pred_check
        %p842 = pneg %p314
      $region70: #{tpu_custom_call.1} parent=59 // pred_check_branch
        %844 = sbr.rel (%p842) target = $region72
      $region71: #{tpu_custom_call.1} parent=59 // pred_region
        _
      $region72: #{tpu_custom_call.1} parent=59 // pred_fallthru
        _
    $region60: #{tpu_custom_call.1} parent=5 // pred_fallthru
      _
    %p845 = scmp.le.s32.totalorder 2, %s19
    // Predicated region
    $region73: #{tpu_custom_call.1} parent=5 // pred_check
      %p846 = pneg %p845
    $region74: #{tpu_custom_call.1} parent=5 // pred_check_branch
      %848 = sbr.rel (%p846) target = $region76
    $region75: #{tpu_custom_call.1} parent=5 // pred_region
      %s849 = ssub.s32 %s19, 2
      // Predicated region
      $region77: #{tpu_custom_call.1} parent=75 // pred_check
        %p850 = pneg %p268
      $region78: #{tpu_custom_call.1} parent=75 // pred_check_branch
        %852 = sbr.rel (%p850) target = $region80
      $region79: #{tpu_custom_call.1} parent=75 // pred_region
        %p853 = scmp.lt.s32.totalorder %s25, 1
        %s854 = scalar_select %p853, %s25, 1
        %s855 = smul.addr %s854, 8
        %s856 = scalar_lea.vmem %s10, %s855
      $region80: #{tpu_custom_call.1} parent=75 // pred_fallthru
        _
      // Predicated region
      $region81: #{tpu_custom_call.1} parent=75 // pred_check
        %p857 = pneg %p294
      $region82: #{tpu_custom_call.1} parent=75 // pred_check_branch
        %859 = sbr.rel (%p857) target = $region84
      $region83: #{tpu_custom_call.1} parent=75 // pred_region
        %p860 = scmp.lt.s32.totalorder %s25, 1
        %s861 = scalar_select %p860, %s25, 1
        %s862 = smul.addr %s861, 8
        %s863 = scalar_lea.vmem %s11, %s862
      $region84: #{tpu_custom_call.1} parent=75 // pred_fallthru
        _
      // Predicated region
      $region85: #{tpu_custom_call.1} parent=75 // pred_check
        %p864 = pneg %p320
      $region86: #{tpu_custom_call.1} parent=75 // pred_check_branch
        %866 = sbr.rel (%p864) target = $region88
      $region87: #{tpu_custom_call.1} parent=75 // pred_region
        %p867 = scmp.lt.s32.totalorder %s25, 1
        %s868 = scalar_select %p867, %s25, 1
        %s869 = smul.addr %s868, 8
        %s870 = scalar_lea.vmem %s12, %s869
      $region88: #{tpu_custom_call.1} parent=75 // pred_fallthru
        _
    $region76: #{tpu_custom_call.1} parent=5 // pred_fallthru
      _
  $region6: #{tpu_custom_call.1} parent=0 // loop_footer
    %s23 = sadd.s32 1, %s19
  $region7: #{tpu_custom_call.1} parent=0 // loop_footer_branch
    %18 = sbr.rel target = $region3
  $region8: #{tpu_custom_call.1} parent=0 // loop_exit
    _

</llo_original>
